<compile_context>
chip_gen: v6e
topology: v6e:2x2x1
jax: 0.10.0
libtpu: 0.0.40
codegen_flags: <defaults>
</compile_context>

<pallas_src>
import functools

import jax
import jax.numpy as jnp
from jax.experimental import pallas as pl
from jax.experimental.pallas import tpu as pltpu


def _round_up(x, m):
    return ((x + m - 1) // m) * m


def imu_mlp_kernel(x_ref, w1, w2, w3, w4, w5, b_ref, o_ref,
                   *, h1, h4, h16, out_pad, out_features):
    """Fused 5-layer MLP.  BN folded into weights; biases packed in b_ref.

    Matmul operands are bf16, accumulation / bias-add / ReLU are f32.
    """
    f32 = jnp.float32
    bf16 = jnp.bfloat16

    x = x_ref[...]                                         # bf16 (tb, feat)

    # --- MLP #1 : (Linear+BN) -> ReLU -> (Linear+BN) -> ReLU ---
    h = jnp.dot(x, w1[...], preferred_element_type=f32) + b_ref[0:1, :h1]
    h = jnp.maximum(h, 0.0).astype(bf16)
    h = jnp.dot(h, w2[...], preferred_element_type=f32) + b_ref[1:2, :h4]
    h = jnp.maximum(h, 0.0).astype(bf16)

    # --- Dropout(0.5): identity in eval mode ---

    # --- MLP #2 : (Linear+BN) -> ReLU -> (Linear+BN) -> ReLU ---
    h = jnp.dot(h, w3[...], preferred_element_type=f32) + b_ref[2:3, :h4]
    h = jnp.maximum(h, 0.0).astype(bf16)
    h = jnp.dot(h, w4[...], preferred_element_type=f32) + b_ref[3:4, :h16]
    h = jnp.maximum(h, 0.0).astype(bf16)

    # --- final Linear: w5 is lane-padded to out_pad for the MXU; slice the
    #     result to the true output width before the (masked) store. ---
    y = jnp.dot(h, w5[...], preferred_element_type=f32) + b_ref[4:5, :out_pad]
    o_ref[...] = y[:, :out_features]


def init_imu_mlp_params(key, input_size, hidden_size, output_size):
    """Raw parameters mirroring the PyTorch module (Linear + eval-mode BN stats).

    Linear weights are stored transposed, (in_features, out_features), with the
    PyTorch default U(-1/sqrt(fan_in), 1/sqrt(fan_in)) init.  BN params use
    random "trained-like" values so the fold is actually exercised.
    """
    h4 = hidden_size // 4
    h16 = hidden_size // 16
    dims = [(input_size, hidden_size), (hidden_size, h4),
            (h4, h4), (h4, h16), (h16, output_size)]

    k_lin, k_bn = jax.random.split(key)
    lin_keys = jax.random.split(k_lin, len(dims))
    linears = []
    for k, (fi, fo) in zip(lin_keys, dims):
        kw, kb = jax.random.split(k)
        bound = 1.0 / jnp.sqrt(jnp.float32(fi))
        w = jax.random.uniform(kw, (fi, fo), jnp.float32, -bound, bound)
        b = jax.random.uniform(kb, (fo,), jnp.float32, -bound, bound)
        linears.append((w, b))

    bn_widths = (hidden_size, h4, h4, h16)
    bn_keys = jax.random.split(k_bn, len(bn_widths))
    bns = []
    for k, n in zip(bn_keys, bn_widths):
        kg, kb2, km, kv = jax.random.split(k, 4)
        bns.append(dict(
            gamma=jax.random.uniform(kg, (n,), jnp.float32, 0.5, 1.5),
            beta=jax.random.uniform(kb2, (n,), jnp.float32, -0.5, 0.5),
            mean=jax.random.uniform(km, (n,), jnp.float32, -0.5, 0.5),
            var=jax.random.uniform(kv, (n,), jnp.float32, 0.5, 1.5),
        ))
    return linears, bns


def fold_params_for_kernel(linears, bns, eps=1e-5):
    """Fold eval-mode BN into the preceding Linear (in f32), lane-pad the final
    layer, pack all biases into one (8, 128k) f32 tile, store weights as bf16."""
    folded_w, folded_b = [], []
    for i, (w, b) in enumerate(linears):
        if i < len(bns):
            bn = bns[i]
            scale = bn["gamma"] / jnp.sqrt(bn["var"] + eps)
            shift = bn["beta"] - bn["mean"] * scale
            w = w * scale[None, :]
            b = b * scale + shift
        folded_w.append(w)
        folded_b.append(b)

    # Lane-dense final weight: pad out-features up to a multiple of 128 (the
    # output array itself is NOT padded; the kernel slices before storing).
    out = folded_w[-1].shape[1]
    out_pad = _round_up(out, 128)
    if out_pad != out:
        folded_w[-1] = jnp.pad(folded_w[-1], ((0, 0), (0, out_pad - out)))
        folded_b[-1] = jnp.pad(folded_b[-1], (0, out_pad - out))

    # Pack all 5 biases into one sublane-aligned f32 tile (row i = layer i+1).
    pad = _round_up(max(bb.shape[0] for bb in folded_b), 128)
    packed = jnp.zeros((8, pad), jnp.float32)
    for i, bb in enumerate(folded_b):
        packed = packed.at[i, :bb.shape[0]].set(bb)

    # bf16 matmul operands (f32 accumulation happens in the kernel).
    folded_w = [w.astype(jnp.bfloat16) for w in folded_w]
    return tuple(folded_w) + (packed,)


@functools.partial(jax.jit, static_argnames=("output_size", "block_b"))
def imu_mlp_forward(x, kernel_params, *, output_size, block_b=4096):
    w1, w2, w3, w4, w5, biases = kernel_params

    b = x.shape[0]
    x2d = x.reshape(b, -1).astype(jnp.bfloat16)     # bf16 halves x DMA bytes
    feat = x2d.shape[1]

    h1 = w1.shape[1]
    h4 = w2.shape[1]
    h16 = w4.shape[1]
    out_pad = w5.shape[1]

    # Batch tile: as large as reasonable (amortize per-step overhead), but
    # capped at ceil(b/2) so the grid has >= 2 steps for v7x megacore sharding.
    tb_full = _round_up(b, 8)
    if b >= 16:
        tb = min(block_b, _round_up(pl.cdiv(b, 2), 8), tb_full)
    else:
        tb = tb_full
    grid = (pl.cdiv(b, tb),)

    kern = functools.partial(imu_mlp_kernel, h1=h1, h4=h4, h16=h16,
                             out_pad=out_pad, out_features=output_size)
    resident = lambda i: (0, 0)   # weights / biases: same block every step -> VMEM-resident

    out = pl.pallas_call(
        kern,
        out_shape=jax.ShapeDtypeStruct((b, output_size), jnp.float32),
        grid=grid,
        in_specs=[
            pl.BlockSpec((tb, feat), lambda i: (i, 0)),   # x: tiled over batch
            pl.BlockSpec(w1.shape, resident),
            pl.BlockSpec(w2.shape, resident),
            pl.BlockSpec(w3.shape, resident),
            pl.BlockSpec(w4.shape, resident),
            pl.BlockSpec(w5.shape, resident),
            pl.BlockSpec(biases.shape, resident),
        ],
        # Last block dim equals the full array dim -> legal unpadded output;
        # the narrow store only costs vst slots, which have slack (MXU-bound).
        out_specs=pl.BlockSpec((tb, output_size), lambda i: (i, 0)),
        compiler_params=pltpu.CompilerParams(
            dimension_semantics=("parallel",),            # megacore sharding on v7x
            vmem_limit_bytes=32 * 1024 * 1024,            # clears v5e 16MiB default,
        ),                                                # within v7x 64MiB physical
    )(x2d, w1, w2, w3, w4, w5, biases)

    return out


def _reference_forward(x, linears, bns, eps=1e-5):
    """Pure-JAX f32 reference using the raw (unfolded) parameters."""
    h = x.reshape(x.shape[0], -1).astype(jnp.float32)
    for i, (w, b) in enumerate(linears):
        h = h @ w + b
        if i < len(bns):
            bn = bns[i]
            h = (h - bn["mean"]) / jnp.sqrt(bn["var"] + eps) * bn["gamma"] + bn["beta"]
            h = jnp.maximum(h, 0.0)
    return h


def _reference_forward_folded(x, kernel_params, output_size):
    """Pure-JAX reference mirroring the kernel numerics (bf16 operands, f32 acc)."""
    w1, w2, w3, w4, w5, biases = kernel_params
    ws = [w1, w2, w3, w4, w5]
    h = x.reshape(x.shape[0], -1).astype(jnp.bfloat16)
    for i, w in enumerate(ws):
        n = w.shape[1]
        h = jnp.dot(h, w, preferred_element_type=jnp.float32) + biases[i, :n]
        if i < 4:
            h = jnp.maximum(h, 0.0).astype(jnp.bfloat16)
    return h[:, :output_size]


if __name__ == "__main__":
    # IMU input (B, C, T) = (64, 4, 16) -> input_size = 64, hidden = 64, out = 6.
    # B=64 gives a 2-step grid (tb=32) so the pipeline / megacore path is exercised.
    B, C, T = 64, 4, 16
    input_size = C * T
    hidden_size = 64
    output_size = 6

    key = jax.random.PRNGKey(0)
    kx, kp = jax.random.split(key)
    x = jax.random.normal(kx, (B, C, T), jnp.float32)

    linears, bns = init_imu_mlp_params(kp, input_size, hidden_size, output_size)
    kernel_params = fold_params_for_kernel(linears, bns)

    out = imu_mlp_forward(x, kernel_params, output_size=output_size)
    out = jax.block_until_ready(out)
    assert out.shape == (B, output_size)

    # Tight check vs a reference that uses the same bf16 operands / f32 accum.
    ref_bf16 = _reference_forward_folded(x, kernel_params, output_size)
    assert jnp.allclose(out, ref_bf16, atol=1e-2, rtol=1e-2), "mismatch vs bf16 reference"

    # Loose check vs the full-f32 unfolded reference (bf16 operand rounding).
    ref_f32 = _reference_forward(x, linears, bns)
    assert jnp.allclose(out, ref_f32, atol=5e-2, rtol=5e-2), "mismatch vs f32 reference"

    print("KERNEL_OK")
</pallas_src>

<mosaic_0001>
module attributes {stable_mosaic.version = 11 : i64} {
  func.func @imu_mlp_kernel(%arg0: i32, %arg1: memref<32x64xbf16, #tpu.memory_space<vmem>>, %arg2: memref<64x64xbf16, #tpu.memory_space<vmem>>, %arg3: memref<64x16xbf16, #tpu.memory_space<vmem>>, %arg4: memref<16x16xbf16, #tpu.memory_space<vmem>>, %arg5: memref<16x4xbf16, #tpu.memory_space<vmem>>, %arg6: memref<4x128xbf16, #tpu.memory_space<vmem>>, %arg7: memref<8x128xf32, #tpu.memory_space<vmem>>, %arg8: memref<32x6xf32, #tpu.memory_space<vmem>>) attributes {dimension_semantics = [#tpu.dimension_semantics<parallel>], iteration_bounds = array<i64: 2>, scalar_prefetch = 0 : i64, scratch_operands = 0 : i64, tpu.core_type = #tpu.core_type<tc>, window_params = [{transform_indices = @transform_0, window_bounds = array<i64: 32, 64>}, {pipeline_mode = #tpu.pipeline_mode<synchronous>, transform_indices = @transform_1, window_bounds = array<i64: 64, 64>}, {pipeline_mode = #tpu.pipeline_mode<synchronous>, transform_indices = @transform_2, window_bounds = array<i64: 64, 16>}, {pipeline_mode = #tpu.pipeline_mode<synchronous>, transform_indices = @transform_3, window_bounds = array<i64: 16, 16>}, {pipeline_mode = #tpu.pipeline_mode<synchronous>, transform_indices = @transform_4, window_bounds = array<i64: 16, 4>}, {pipeline_mode = #tpu.pipeline_mode<synchronous>, transform_indices = @transform_5, window_bounds = array<i64: 4, 128>}, {pipeline_mode = #tpu.pipeline_mode<synchronous>, transform_indices = @transform_6, window_bounds = array<i64: 8, 128>}, {transform_indices = @transform_7, window_bounds = array<i64: 32, 6>}]} {
    %c0 = arith.constant 0 : index
    %c0_0 = arith.constant 0 : index
    %0 = vector.load %arg1[%c0, %c0_0] : memref<32x64xbf16, #tpu.memory_space<vmem>>, vector<32x64xbf16>
    %c0_1 = arith.constant 0 : index
    %c0_2 = arith.constant 0 : index
    %1 = vector.load %arg2[%c0_1, %c0_2] : memref<64x64xbf16, #tpu.memory_space<vmem>>, vector<64x64xbf16>
    %cst = arith.constant dense<0.000000e+00> : vector<32x64xf32>
    %2 = tpu.matmul %0, %1, %cst {dimension_numbers = #tpu.dot_dimension_numbers<[1], [0], [0], [1], [0, 0, 1, 1], [], []>} : vector<32x64xbf16>, vector<64x64xbf16>, vector<32x64xf32> -> vector<32x64xf32>
    %c0_3 = arith.constant 0 : index
    %c0_4 = arith.constant 0 : index
    %3 = vector.load %arg7[%c0_3, %c0_4] : memref<8x128xf32, #tpu.memory_space<vmem>>, vector<1x64xf32>
    %4 = vector.broadcast %3 : vector<1x64xf32> to vector<32x64xf32>
    %5 = arith.addf %2, %4 : vector<32x64xf32>
    %cst_5 = arith.constant 0.000000e+00 : f32
    %6 = vector.broadcast %cst_5 : f32 to vector<32x64xf32>
    %7 = arith.maximumf %5, %6 : vector<32x64xf32>
    %8 = arith.truncf %7 : vector<32x64xf32> to vector<32x64xbf16>
    %c0_6 = arith.constant 0 : index
    %c0_7 = arith.constant 0 : index
    %9 = vector.load %arg3[%c0_6, %c0_7] : memref<64x16xbf16, #tpu.memory_space<vmem>>, vector<64x16xbf16>
    %cst_8 = arith.constant dense<0.000000e+00> : vector<32x16xf32>
    %10 = tpu.matmul %8, %9, %cst_8 {dimension_numbers = #tpu.dot_dimension_numbers<[1], [0], [0], [1], [0, 0, 1, 1], [], []>} : vector<32x64xbf16>, vector<64x16xbf16>, vector<32x16xf32> -> vector<32x16xf32>
    %c1 = arith.constant 1 : index
    %c0_9 = arith.constant 0 : index
    %11 = vector.load %arg7[%c1, %c0_9] : memref<8x128xf32, #tpu.memory_space<vmem>>, vector<1x16xf32>
    %12 = vector.broadcast %11 : vector<1x16xf32> to vector<32x16xf32>
    %13 = arith.addf %10, %12 : vector<32x16xf32>
    %cst_10 = arith.constant 0.000000e+00 : f32
    %14 = vector.broadcast %cst_10 : f32 to vector<32x16xf32>
    %15 = arith.maximumf %13, %14 : vector<32x16xf32>
    %16 = arith.truncf %15 : vector<32x16xf32> to vector<32x16xbf16>
    %c0_11 = arith.constant 0 : index
    %c0_12 = arith.constant 0 : index
    %17 = vector.load %arg4[%c0_11, %c0_12] : memref<16x16xbf16, #tpu.memory_space<vmem>>, vector<16x16xbf16>
    %cst_13 = arith.constant dense<0.000000e+00> : vector<32x16xf32>
    %18 = tpu.matmul %16, %17, %cst_13 {dimension_numbers = #tpu.dot_dimension_numbers<[1], [0], [0], [1], [0, 0, 1, 1], [], []>} : vector<32x16xbf16>, vector<16x16xbf16>, vector<32x16xf32> -> vector<32x16xf32>
    %c2 = arith.constant 2 : index
    %c0_14 = arith.constant 0 : index
    %19 = vector.load %arg7[%c2, %c0_14] : memref<8x128xf32, #tpu.memory_space<vmem>>, vector<1x16xf32>
    %20 = vector.broadcast %19 : vector<1x16xf32> to vector<32x16xf32>
    %21 = arith.addf %18, %20 : vector<32x16xf32>
    %cst_15 = arith.constant 0.000000e+00 : f32
    %22 = vector.broadcast %cst_15 : f32 to vector<32x16xf32>
    %23 = arith.maximumf %21, %22 : vector<32x16xf32>
    %24 = arith.truncf %23 : vector<32x16xf32> to vector<32x16xbf16>
    %c0_16 = arith.constant 0 : index
    %c0_17 = arith.constant 0 : index
    %25 = vector.load %arg5[%c0_16, %c0_17] : memref<16x4xbf16, #tpu.memory_space<vmem>>, vector<16x4xbf16>
    %cst_18 = arith.constant dense<0.000000e+00> : vector<32x4xf32>
    %26 = tpu.matmul %24, %25, %cst_18 {dimension_numbers = #tpu.dot_dimension_numbers<[1], [0], [0], [1], [0, 0, 1, 1], [], []>} : vector<32x16xbf16>, vector<16x4xbf16>, vector<32x4xf32> -> vector<32x4xf32>
    %c3 = arith.constant 3 : index
    %c0_19 = arith.constant 0 : index
    %27 = vector.load %arg7[%c3, %c0_19] : memref<8x128xf32, #tpu.memory_space<vmem>>, vector<1x4xf32>
    %28 = vector.broadcast %27 : vector<1x4xf32> to vector<32x4xf32>
    %29 = arith.addf %26, %28 : vector<32x4xf32>
    %cst_20 = arith.constant 0.000000e+00 : f32
    %30 = vector.broadcast %cst_20 : f32 to vector<32x4xf32>
    %31 = arith.maximumf %29, %30 : vector<32x4xf32>
    %32 = arith.truncf %31 : vector<32x4xf32> to vector<32x4xbf16>
    %c0_21 = arith.constant 0 : index
    %c0_22 = arith.constant 0 : index
    %33 = vector.load %arg6[%c0_21, %c0_22] : memref<4x128xbf16, #tpu.memory_space<vmem>>, vector<4x128xbf16>
    %cst_23 = arith.constant dense<0.000000e+00> : vector<32x128xf32>
    %34 = tpu.matmul %32, %33, %cst_23 {dimension_numbers = #tpu.dot_dimension_numbers<[1], [0], [0], [1], [0, 0, 1, 1], [], []>} : vector<32x4xbf16>, vector<4x128xbf16>, vector<32x128xf32> -> vector<32x128xf32>
    %c4 = arith.constant 4 : index
    %c0_24 = arith.constant 0 : index
    %35 = vector.load %arg7[%c4, %c0_24] : memref<8x128xf32, #tpu.memory_space<vmem>>, vector<1x128xf32>
    %36 = vector.broadcast %35 : vector<1x128xf32> to vector<32x128xf32>
    %37 = arith.addf %34, %36 : vector<32x128xf32>
    %38 = vector.extract_strided_slice %37 {offsets = [0, 0], sizes = [32, 6], strides = [1, 1]} : vector<32x128xf32> to vector<32x6xf32>
    %c0_25 = arith.constant 0 : index
    %c0_26 = arith.constant 0 : index
    %39 = vector.load %arg8[%c0_25, %c0_26] : memref<32x6xf32, #tpu.memory_space<vmem>>, vector<32x6xf32>
    tpu.vector_store %arg8[%c0_25, %c0_26], %38 {strides = array<i32>} : memref<32x6xf32, #tpu.memory_space<vmem>>, vector<32x6xf32>,
    return
  }
  func.func @transform_0(%arg0: i32) -> (i32, i32) {
    %c0_i32 = arith.constant 0 : i32
    %c0_i32_0 = arith.constant 0 : i32
    return %arg0, %c0_i32 : i32, i32
  }
  func.func @transform_1(%arg0: i32) -> (i32, i32) {
    %c0_i32 = arith.constant 0 : i32
    %c0_i32_0 = arith.constant 0 : i32
    %c0_i32_1 = arith.constant 0 : i32
    return %c0_i32, %c0_i32_0 : i32, i32
  }
  func.func @transform_2(%arg0: i32) -> (i32, i32) {
    %c0_i32 = arith.constant 0 : i32
    %c0_i32_0 = arith.constant 0 : i32
    %c0_i32_1 = arith.constant 0 : i32
    return %c0_i32, %c0_i32_0 : i32, i32
  }
  func.func @transform_3(%arg0: i32) -> (i32, i32) {
    %c0_i32 = arith.constant 0 : i32
    %c0_i32_0 = arith.constant 0 : i32
    %c0_i32_1 = arith.constant 0 : i32
    return %c0_i32, %c0_i32_0 : i32, i32
  }
  func.func @transform_4(%arg0: i32) -> (i32, i32) {
    %c0_i32 = arith.constant 0 : i32
    %c0_i32_0 = arith.constant 0 : i32
    %c0_i32_1 = arith.constant 0 : i32
    return %c0_i32, %c0_i32_0 : i32, i32
  }
  func.func @transform_5(%arg0: i32) -> (i32, i32) {
    %c0_i32 = arith.constant 0 : i32
    %c0_i32_0 = arith.constant 0 : i32
    %c0_i32_1 = arith.constant 0 : i32
    return %c0_i32, %c0_i32_0 : i32, i32
  }
  func.func @transform_6(%arg0: i32) -> (i32, i32) {
    %c0_i32 = arith.constant 0 : i32
    %c0_i32_0 = arith.constant 0 : i32
    %c0_i32_1 = arith.constant 0 : i32
    return %c0_i32, %c0_i32_0 : i32, i32
  }
  func.func @transform_7(%arg0: i32) -> (i32, i32) {
    %c0_i32 = arith.constant 0 : i32
    %c0_i32_0 = arith.constant 0 : i32
    return %arg0, %c0_i32 : i32, i32
  }
}

</mosaic_0001>

<llo_original>
// kernel: imu_mlp_forward.1
$region0: #{imu_mlp_forward.1}
  #allocation0 [shape = 'u32[]', space=smem, size = 0x4, offset = 0x4, fixed_abs, tag = 'smem constant byte address 0x4 - core index']
  #allocation1 [shape = 'u32[144,128]{1,0:T(1,128)}', space=vmem, size = 0x12000, scoped, tag = 'internal scratch']
  %s0 = inlined_call_operand.vmem [shape: bf16[64,64], index: 0, kind: input, shape index: {}]
  %s1 = inlined_call_operand.vmem [shape: bf16[64,64], index: 1, kind: input, shape index: {}]
  %s2 = inlined_call_operand.vmem [shape: bf16[64,16], index: 2, kind: input, shape index: {}]
  %s3 = inlined_call_operand.vmem [shape: bf16[16,16], index: 3, kind: input, shape index: {}]
  %s4 = inlined_call_operand.vmem [shape: bf16[16,4], index: 4, kind: input, shape index: {}]
  %s5 = inlined_call_operand.vmem [shape: bf16[4,128], index: 5, kind: input, shape index: {}]
  %s6 = inlined_call_operand.vmem [shape: f32[8,128], index: 6, kind: input, shape index: {}]
  %s7 = inlined_call_operand.vmem [shape: f32[64,6], index: 7, kind: output, shape index: {}]
  %s8 = sld [smem:[#allocation0]]
  $region61: #{imu_mlp_forward.1} parent=0
    _
  %s10 = ssub.s32 1, %s8
  %s11 = scalar_select 0, %s10, %s8
  loop: start=0, step=1, limit=4
  $region2: #{imu_mlp_forward.1} parent=0 // loop_pre_header
    _
  $region3: #{imu_mlp_forward.1} parent=0 // loop_header
    %s13 = sphi 0, %s17
    %p14 = scmp.ge.s32.totalorder %s13, 4
    %s23 = sphi 0, %s25
    %s26 = sphi 0, %s23
    %s27 = sphi 0, %s26
    %s43 = sphi 0, %s27
    %s47 = sphi 0, %s47
    %s49 = sphi 0, %s47
    %s50 = sphi 0, %s49
    %s64 = sphi 0, %s50
    %s68 = sphi 0, %s68
    %s70 = sphi 0, %s68
    %s71 = sphi 0, %s70
    %s85 = sphi 0, %s71
    %s89 = sphi 0, %s89
    %s91 = sphi 0, %s89
    %s92 = sphi 0, %s91
    %s106 = sphi 0, %s92
    %s110 = sphi 0, %s110
    %s112 = sphi 0, %s110
    %s113 = sphi 0, %s112
    %s127 = sphi 0, %s113
    %s131 = sphi 0, %s131
    %s133 = sphi 0, %s131
    %s134 = sphi 0, %s133
    %s148 = sphi 0, %s134
    %s152 = sphi 0, %s152
    %s154 = sphi 0, %s152
    %s155 = sphi 0, %s154
    %s169 = sphi 0, %s155
    %s175 = sphi 0, %s177
    %s178 = sphi 0, %s175
    %s179 = sphi 0, %s178
    %s195 = sphi 0, %s179
  $region4: #{imu_mlp_forward.1} parent=0 // loop_header_branch
    %16 = sbr.rel (%p14) target = $region8
  $region5: #{imu_mlp_forward.1} parent=0 // loop_body
    %s18 = ssub.s32 %s13, 1
    %s19 = ssub.s32 %s13, 2
    %s20 = sadd.s32 %s13, 1
    %s21 = ssub.s32 %s13, %s20
    %p22 = scmp.eq.s32.totalorder %s21, 0
    %s24 = sadd.s32 %s23, 1
    %s25 = scalar_select %p22, %s23, %s24
    %p28 = pneg %p22
    %p29 = scmp.eq.s32.totalorder %s13, 1
    %p30 = por %p28, %p29
    %p31 = scmp.ne.s32.totalorder %s23, %s26
    %p32 = scmp.eq.s32.totalorder %s13, 0
    %p33 = por %p31, %p32
    %p34 = scmp.ne.s32.totalorder %s23, %s26
    %p35 = scmp.eq.s32.totalorder %s18, 1
    %p36 = por %p34, %p35
    %p37 = scmp.ne.s32.totalorder %s26, %s27
    %p38 = scmp.eq.s32.totalorder %s18, 0
    %p39 = por %p37, %p38
    %p40 = scmp.ne.s32.totalorder %s26, %s27
    %p41 = scmp.eq.s32.totalorder %s19, 1
    %p42 = por %p40, %p41
    %p44 = scmp.ne.s32.totalorder %s27, %s43
    %p45 = scmp.eq.s32.totalorder %s19, 0
    %p46 = por %p44, %p45
    %s48 = sadd.s32 %s47, 1
    %p51 = scmp.eq.s32.totalorder %s13, 1
    %p52 = scmp.ne.s32.totalorder %s47, %s49
    %p53 = scmp.eq.s32.totalorder %s13, 0
    %p54 = por %p52, %p53
    %p55 = scmp.ne.s32.totalorder %s47, %s49
    %p56 = scmp.eq.s32.totalorder %s18, 1
    %p57 = por %p55, %p56
    %p58 = scmp.ne.s32.totalorder %s49, %s50
    %p59 = scmp.eq.s32.totalorder %s18, 0
    %p60 = por %p58, %p59
    %p61 = scmp.ne.s32.totalorder %s49, %s50
    %p62 = scmp.eq.s32.totalorder %s19, 1
    %p63 = por %p61, %p62
    %p65 = scmp.ne.s32.totalorder %s50, %s64
    %p66 = scmp.eq.s32.totalorder %s19, 0
    %p67 = por %p65, %p66
    %s69 = sadd.s32 %s68, 1
    %p72 = scmp.eq.s32.totalorder %s13, 1
    %p73 = scmp.ne.s32.totalorder %s68, %s70
    %p74 = scmp.eq.s32.totalorder %s13, 0
    %p75 = por %p73, %p74
    %p76 = scmp.ne.s32.totalorder %s68, %s70
    %p77 = scmp.eq.s32.totalorder %s18, 1
    %p78 = por %p76, %p77
    %p79 = scmp.ne.s32.totalorder %s70, %s71
    %p80 = scmp.eq.s32.totalorder %s18, 0
    %p81 = por %p79, %p80
    %p82 = scmp.ne.s32.totalorder %s70, %s71
    %p83 = scmp.eq.s32.totalorder %s19, 1
    %p84 = por %p82, %p83
    %p86 = scmp.ne.s32.totalorder %s71, %s85
    %p87 = scmp.eq.s32.totalorder %s19, 0
    %p88 = por %p86, %p87
    %s90 = sadd.s32 %s89, 1
    %p93 = scmp.eq.s32.totalorder %s13, 1
    %p94 = scmp.ne.s32.totalorder %s89, %s91
    %p95 = scmp.eq.s32.totalorder %s13, 0
    %p96 = por %p94, %p95
    %p97 = scmp.ne.s32.totalorder %s89, %s91
    %p98 = scmp.eq.s32.totalorder %s18, 1
    %p99 = por %p97, %p98
    %p100 = scmp.ne.s32.totalorder %s91, %s92
    %p101 = scmp.eq.s32.totalorder %s18, 0
    %p102 = por %p100, %p101
    %p103 = scmp.ne.s32.totalorder %s91, %s92
    %p104 = scmp.eq.s32.totalorder %s19, 1
    %p105 = por %p103, %p104
    %p107 = scmp.ne.s32.totalorder %s92, %s106
    %p108 = scmp.eq.s32.totalorder %s19, 0
    %p109 = por %p107, %p108
    %s111 = sadd.s32 %s110, 1
    %p114 = scmp.eq.s32.totalorder %s13, 1
    %p115 = scmp.ne.s32.totalorder %s110, %s112
    %p116 = scmp.eq.s32.totalorder %s13, 0
    %p117 = por %p115, %p116
    %p118 = scmp.ne.s32.totalorder %s110, %s112
    %p119 = scmp.eq.s32.totalorder %s18, 1
    %p120 = por %p118, %p119
    %p121 = scmp.ne.s32.totalorder %s112, %s113
    %p122 = scmp.eq.s32.totalorder %s18, 0
    %p123 = por %p121, %p122
    %p124 = scmp.ne.s32.totalorder %s112, %s113
    %p125 = scmp.eq.s32.totalorder %s19, 1
    %p126 = por %p124, %p125
    %p128 = scmp.ne.s32.totalorder %s113, %s127
    %p129 = scmp.eq.s32.totalorder %s19, 0
    %p130 = por %p128, %p129
    %s132 = sadd.s32 %s131, 1
    %p135 = scmp.eq.s32.totalorder %s13, 1
    %p136 = scmp.ne.s32.totalorder %s131, %s133
    %p137 = scmp.eq.s32.totalorder %s13, 0
    %p138 = por %p136, %p137
    %p139 = scmp.ne.s32.totalorder %s131, %s133
    %p140 = scmp.eq.s32.totalorder %s18, 1
    %p141 = por %p139, %p140
    %p142 = scmp.ne.s32.totalorder %s133, %s134
    %p143 = scmp.eq.s32.totalorder %s18, 0
    %p144 = por %p142, %p143
    %p145 = scmp.ne.s32.totalorder %s133, %s134
    %p146 = scmp.eq.s32.totalorder %s19, 1
    %p147 = por %p145, %p146
    %p149 = scmp.ne.s32.totalorder %s134, %s148
    %p150 = scmp.eq.s32.totalorder %s19, 0
    %p151 = por %p149, %p150
    %s153 = sadd.s32 %s152, 1
    %p156 = scmp.eq.s32.totalorder %s13, 1
    %p157 = scmp.ne.s32.totalorder %s152, %s154
    %p158 = scmp.eq.s32.totalorder %s13, 0
    %p159 = por %p157, %p158
    %p160 = scmp.ne.s32.totalorder %s152, %s154
    %p161 = scmp.eq.s32.totalorder %s18, 1
    %p162 = por %p160, %p161
    %p163 = scmp.ne.s32.totalorder %s154, %s155
    %p164 = scmp.eq.s32.totalorder %s18, 0
    %p165 = por %p163, %p164
    %p166 = scmp.ne.s32.totalorder %s154, %s155
    %p167 = scmp.eq.s32.totalorder %s19, 1
    %p168 = por %p166, %p167
    %p170 = scmp.ne.s32.totalorder %s155, %s169
    %p171 = scmp.eq.s32.totalorder %s19, 0
    %p172 = por %p170, %p171
    %s173 = ssub.s32 %s13, %s20
    %p174 = scmp.eq.s32.totalorder %s173, 0
    %s176 = sadd.s32 %s175, 1
    %s177 = scalar_select %p174, %s175, %s176
    %p180 = pneg %p174
    %p181 = scmp.eq.s32.totalorder %s13, 1
    %p182 = por %p180, %p181
    %p183 = scmp.ne.s32.totalorder %s175, %s178
    %p184 = scmp.eq.s32.totalorder %s13, 0
    %p185 = por %p183, %p184
    %p186 = scmp.ne.s32.totalorder %s175, %s178
    %p187 = scmp.eq.s32.totalorder %s18, 1
    %p188 = por %p186, %p187
    %p189 = scmp.ne.s32.totalorder %s178, %s179
    %p190 = scmp.eq.s32.totalorder %s18, 0
    %p191 = por %p189, %p190
    %p192 = scmp.ne.s32.totalorder %s178, %s179
    %p193 = scmp.eq.s32.totalorder %s19, 1
    %p194 = por %p192, %p193
    %p196 = scmp.ne.s32.totalorder %s179, %s195
    %p197 = scmp.eq.s32.totalorder %s19, 0
    %p198 = por %p196, %p197
    %p199 = scmp.le.s32.totalorder 1, %s13
    %p200 = scmp.lt.s32.totalorder %s13, 3
    %p201 = pnand %p199, %p200
    %p202 = pneg %p201
    // Predicated region
    $region9: #{imu_mlp_forward.1} parent=5 // pred_check
      _
    $region10: #{imu_mlp_forward.1} parent=5 // pred_check_branch
      %204 = sbr.rel (%p201) target = $region12
    $region11: #{imu_mlp_forward.1} parent=5 // pred_region
      %s205 = ssub.s32 %s13, 1
      // Predicated region
      $region13: #{imu_mlp_forward.1} parent=11 // pred_check
        %p206 = pneg %p60
      $region14: #{imu_mlp_forward.1} parent=11 // pred_check_branch
        %208 = sbr.rel (%p206) target = $region16
      $region15: #{imu_mlp_forward.1} parent=11 // pred_region
        _
      $region16: #{imu_mlp_forward.1} parent=11 // pred_fallthru
        _
      // Predicated region
      $region17: #{imu_mlp_forward.1} parent=11 // pred_check
        %p209 = pneg %p81
      $region18: #{imu_mlp_forward.1} parent=11 // pred_check_branch
        %211 = sbr.rel (%p209) target = $region20
      $region19: #{imu_mlp_forward.1} parent=11 // pred_region
        _
      $region20: #{imu_mlp_forward.1} parent=11 // pred_fallthru
        _
      // Predicated region
      $region21: #{imu_mlp_forward.1} parent=11 // pred_check
        %p212 = pneg %p102
      $region22: #{imu_mlp_forward.1} parent=11 // pred_check_branch
        %214 = sbr.rel (%p212) target = $region24
      $region23: #{imu_mlp_forward.1} parent=11 // pred_region
        _
      $region24: #{imu_mlp_forward.1} parent=11 // pred_fallthru
        _
      // Predicated region
      $region25: #{imu_mlp_forward.1} parent=11 // pred_check
        %p215 = pneg %p123
      $region26: #{imu_mlp_forward.1} parent=11 // pred_check_branch
        %217 = sbr.rel (%p215) target = $region28
      $region27: #{imu_mlp_forward.1} parent=11 // pred_region
        _
      $region28: #{imu_mlp_forward.1} parent=11 // pred_fallthru
        _
      // Predicated region
      $region29: #{imu_mlp_forward.1} parent=11 // pred_check
        %p218 = pneg %p144
      $region30: #{imu_mlp_forward.1} parent=11 // pred_check_branch
        %220 = sbr.rel (%p218) target = $region32
      $region31: #{imu_mlp_forward.1} parent=11 // pred_region
        _
      $region32: #{imu_mlp_forward.1} parent=11 // pred_fallthru
        _
      // Predicated region
      $region33: #{imu_mlp_forward.1} parent=11 // pred_check
        %p221 = pneg %p165
      $region34: #{imu_mlp_forward.1} parent=11 // pred_check_branch
        %223 = sbr.rel (%p221) target = $region36
      $region35: #{imu_mlp_forward.1} parent=11 // pred_region
        _
      $region36: #{imu_mlp_forward.1} parent=11 // pred_fallthru
        _
    $region12: #{imu_mlp_forward.1} parent=5 // pred_fallthru
      _
    %p224 = scmp.lt.s32.totalorder %s13, 2
    // Predicated region
    $region37: #{imu_mlp_forward.1} parent=5 // pred_check
      %p225 = pneg %p224
    $region38: #{imu_mlp_forward.1} parent=5 // pred_check_branch
      %227 = sbr.rel (%p225) target = $region40
    $region39: #{imu_mlp_forward.1} parent=5 // pred_region
      // Predicated region
      $region41: #{imu_mlp_forward.1} parent=39 // pred_check
        %p228 = pneg %p33
      $region42: #{imu_mlp_forward.1} parent=39 // pred_check_branch
        %230 = sbr.rel (%p228) target = $region44
      $region43: #{imu_mlp_forward.1} parent=39 // pred_region
        %s231 = smul.u32 4, %s13
        %p232 = scmp.lt.s32.totalorder %s231, 7
        %s233 = scalar_select %p232, %s231, 7
        %s234 = smul.addr %s233, 4
        %s235 = scalar_lea.vmem %s0, %s234
        %s236 = smul.u32 4, %s13
      $region44: #{imu_mlp_forward.1} parent=39 // pred_fallthru
        _
    $region40: #{imu_mlp_forward.1} parent=5 // pred_fallthru
      _
    %p237 = scmp.le.s32.totalorder 1, %s13
    %p238 = scmp.lt.s32.totalorder %s13, 3
    %p239 = pnand %p237, %p238
    %p240 = pneg %p239
    // Predicated region
    $region45: #{imu_mlp_forward.1} parent=5 // pred_check
      _
    $region46: #{imu_mlp_forward.1} parent=5 // pred_check_branch
      %242 = sbr.rel (%p239) target = $region48
    $region47: #{imu_mlp_forward.1} parent=5 // pred_region
      %s243 = ssub.s32 %s13, 1
      %s244 = smul.u32 4, %s18
      %p245 = scmp.lt.s32.totalorder %s244, 7
      %s246 = scalar_select %p245, %s244, 7
      %s247 = smul.addr %s246, 4
      %s248 = scalar_lea.vmem %s0, %s247
      %p249 = pneg %p39
      %p250 = pneg %p36
      %p251 = pneg %p60
      %p252 = pneg %p57
      %p253 = pneg %p81
      %p254 = pneg %p78
      %p255 = pneg %p102
      %p256 = pneg %p99
      %p257 = pneg %p123
      %p258 = pneg %p120
      %p259 = pneg %p144
      %p260 = pneg %p141
      %p261 = pneg %p165
      %p262 = pneg %p162
      %p263 = pneg %p191
      %p264 = pneg %p188
      %s265 = smul.u32 4, %s18
      %p266 = scmp.lt.s32.totalorder %s265, 7
      %s267 = scalar_select %p266, %s265, 7
      %s268 = smul.addr %s267, 8
      %s269 = scalar_lea.vmem %s7, %s268
      %s270 = smul.u32 4, %s18
      %p271 = scmp.lt.s32.totalorder %s270, 7
      %s272 = scalar_select %p271, %s270, 7
      %s273 = smul.addr %s272, 4
      %s274 = scalar_lea.vmem %s0, %s273
      %s275 = smul.u32 4, %s18
      %s276 = smul.u32 4, %s18
      %p277 = scmp.lt.s32.totalorder %s276, 7
      %s278 = scalar_select %p277, %s276, 7
      %s279 = smul.addr %s278, 8
      %s280 = scalar_lea.vmem %s7, %s279
      %s281 = smul.u32 4, %s18
      %v283 = vld [vmem:[%s274] sm:$0xf]
      %v284 = vld [vmem:[%s274 + $0x4] sm:$0xf]
      %v285 = vld [vmem:[%s274 + $0x8] sm:$0xf]
      %v286 = vld [vmem:[%s274 + $0xc] sm:$0xf]
      %v287 = vld [vmem:[%s1] sm:$0xf]
      %v288 = vld [vmem:[%s1 + $0x4] sm:$0xf]
      %v289 = vld [vmem:[%s1 + $0x8] sm:$0xf]
      %v290 = vld [vmem:[%s1 + $0xc] sm:$0xf]
      %v291 = vld [vmem:[%s1 + $0x10] sm:$0xf]
      %v292 = vld [vmem:[%s1 + $0x14] sm:$0xf]
      %v293 = vld [vmem:[%s1 + $0x18] sm:$0xf]
      %v294 = vld [vmem:[%s1 + $0x1c] sm:$0xf]
      %v295 = vld [vmem:[%s6] sm:$0x1]
      %v296 = vlaneseq
      %v297 = vshrl.u32 %v296, 7
      %v298 = vsub.s32 0, %v297
      %v299 = vrot.slane %v295, %v298
      %v304 = vunpack.c.l.b16 %v283
      %v305 = vunpack.c.l.b16 %v284
      %v306 = vunpack.c.l.b16 %v285
      %v307 = vunpack.c.l.b16 %v286
      %v308 = vpack.c.b16 %v305, %v304
      %v309 = vpack.c.b16 %v307, %v306
      %v318 = vunpack.c.l.b16 %v287
      %v319 = vunpack.c.l.b16 %v288
      %v320 = vunpack.c.l.b16 %v289
      %v321 = vunpack.c.l.b16 %v290
      %v322 = vunpack.c.l.b16 %v291
      %v323 = vunpack.c.l.b16 %v292
      %v324 = vunpack.c.l.b16 %v293
      %v325 = vunpack.c.l.b16 %v294
      %v326 = vpack.c.b16 %v319, %v318
      %v327 = vpack.c.b16 %v321, %v320
      %v328 = vpack.c.b16 %v323, %v322
      %v329 = vpack.c.b16 %v325, %v324
      %vm334 = vcmask 523264
      %v336 = vsel %vm334, %v308, 0
      %v339 = vsel %vm334, %v309, 0
      %341 = vmatprep.subr.bf16.mxu0 0
      %342 = vmatpush1.bf16.msra.mxu0 0
      %343 = vmatprep.subr.bf16.mxu0 0
      %344 = vmatpush1.bf16.msra.mxu0 0
      %345 = vmatprep.subr.bf16.mxu0 0
      %346 = vmatpush1.bf16.msra.mxu0 0
      %347 = vmatprep.subr.bf16.mxu0 0
      %348 = vmatpush1.bf16.msra.mxu0 0
      %349 = vmatprep.subr.bf16.mxu0 0
      %350 = vmatpush1.bf16.msra.mxu0 %v329
      %351 = vmatprep.subr.bf16.mxu0 0
      %352 = vmatpush1.bf16.msra.mxu0 %v328
      %353 = vmatprep.subr.bf16.mxu0 0
      %354 = vmatpush1.bf16.msra.mxu0 %v327
      %355 = vmatprep.subr.bf16.mxu0 0
      %356 = vmatpush1.bf16.msra.mxu0 %v326
      %357 = vmatprep.subr.bf16.mxu0 0
      %358 = vmatpush2.bf16.msra.mxu0 0
      %359 = vmatprep.subr.bf16.mxu0 0
      %360 = vmatpush2.bf16.msra.mxu0 0
      %361 = vmatprep.subr.bf16.mxu0 0
      %362 = vmatpush2.bf16.msra.mxu0 0
      %363 = vmatprep.subr.bf16.mxu0 0
      %364 = vmatpush2.bf16.msra.mxu0 0
      %365 = vmatprep.subr.bf16.mxu0 0
      %366 = vmatpush2.bf16.msra.mxu0 0
      %367 = vmatprep.subr.bf16.mxu0 0
      %368 = vmatpush2.bf16.msra.mxu0 0
      %369 = vmatprep.subr.bf16.mxu0 0
      %370 = vmatpush2.bf16.msra.mxu0 0
      %371 = vmatprep.subr.bf16.mxu0 0
      %372 = vmatpush2.bf16.msra.mxu0 0
      %373 = vmatprep.mubr.bf16.mxu0 0
      %374 = vmatmul.mubr.bf16.gmra.mxu0 %v336
      %v375 = vpop.f32.mrf.mxu0
      %v376 = vadd.f32 %v299, %v375
      %v377 = vpop.f32.mrf.mxu0
      %v378 = vpop.f32.mrf.mxu0
      %v379 = vadd.f32 %v299, %v378
      %v380 = vpop.f32.mrf.mxu0
      %381 = vmatprep.mubr.bf16.mxu0 0
      %382 = vmatmul.mubr.bf16.gmra.mxu0 %v339
      %v383 = vpop.f32.mrf.mxu0
      %v384 = vadd.f32 %v299, %v383
      %v385 = vpop.f32.mrf.mxu0
      %v386 = vpop.f32.mrf.mxu0
      %v387 = vadd.f32 %v299, %v386
      %v388 = vpop.f32.mrf.mxu0
      %389 = vdwg.mxu0
      %v390 = vmax.f32 %v376, 0.0
      %v391 = vmax.f32 %v379, 0.0
      %v392 = vmax.f32 %v384, 0.0
      %v393 = vmax.f32 %v387, 0.0
      %v394 = vpack.c.bf16 %v391, %v390
      %v395 = vpack.c.bf16 %v393, %v392
      %v396 = vld [vmem:[%s2] sm:$0xf]
      %v397 = vld [vmem:[%s2 + $0x4] sm:$0xf]
      %v398 = vld [vmem:[%s2 + $0x8] sm:$0xf]
      %v399 = vld [vmem:[%s2 + $0xc] sm:$0xf]
      %v400 = vld [vmem:[%s2 + $0x10] sm:$0xf]
      %v401 = vld [vmem:[%s2 + $0x14] sm:$0xf]
      %v402 = vld [vmem:[%s2 + $0x18] sm:$0xf]
      %v403 = vld [vmem:[%s2 + $0x1c] sm:$0xf]
      %v404 = vld [vmem:[%s6 + $0x1] sm:$0x1]
      %v405 = vlaneseq
      %v406 = vshrl.u32 %v405, 7
      %v407 = vsub.s32 0, %v406
      %v408 = vrot.slane %v404, %v407
      %v417 = vunpack.c.l.b16 %v396
      %v418 = vunpack.c.l.b16 %v397
      %v419 = vunpack.c.l.b16 %v398
      %v420 = vunpack.c.l.b16 %v399
      %v421 = vunpack.c.l.b16 %v400
      %v422 = vunpack.c.l.b16 %v401
      %v423 = vunpack.c.l.b16 %v402
      %v424 = vunpack.c.l.b16 %v403
      %v425 = vpack.c.b16 %v418, %v417
      %v426 = vpack.c.b16 %v420, %v419
      %v427 = vpack.c.b16 %v422, %v421
      %v428 = vpack.c.b16 %v424, %v423
      %v434 = vsel %vm334, %v394, 0
      %v437 = vsel %vm334, %v395, 0
      %439 = vmatprep.subr.bf16.mxu0 0
      %440 = vmatpush1.bf16.msra.mxu0 0
      %441 = vmatprep.subr.bf16.mxu0 0
      %442 = vmatpush1.bf16.msra.mxu0 0
      %443 = vmatprep.subr.bf16.mxu0 0
      %444 = vmatpush1.bf16.msra.mxu0 0
      %445 = vmatprep.subr.bf16.mxu0 0
      %446 = vmatpush1.bf16.msra.mxu0 0
      %447 = vmatprep.subr.bf16.mxu0 0
      %448 = vmatpush1.bf16.msra.mxu0 %v428
      %449 = vmatprep.subr.bf16.mxu0 0
      %450 = vmatpush1.bf16.msra.mxu0 %v427
      %451 = vmatprep.subr.bf16.mxu0 0
      %452 = vmatpush1.bf16.msra.mxu0 %v426
      %453 = vmatprep.subr.bf16.mxu0 0
      %454 = vmatpush1.bf16.msra.mxu0 %v425
      %455 = vmatprep.subr.bf16.mxu0 0
      %456 = vmatpush2.bf16.msra.mxu0 0
      %457 = vmatprep.subr.bf16.mxu0 0
      %458 = vmatpush2.bf16.msra.mxu0 0
      %459 = vmatprep.subr.bf16.mxu0 0
      %460 = vmatpush2.bf16.msra.mxu0 0
      %461 = vmatprep.subr.bf16.mxu0 0
      %462 = vmatpush2.bf16.msra.mxu0 0
      %463 = vmatprep.subr.bf16.mxu0 0
      %464 = vmatpush2.bf16.msra.mxu0 0
      %465 = vmatprep.subr.bf16.mxu0 0
      %466 = vmatpush2.bf16.msra.mxu0 0
      %467 = vmatprep.subr.bf16.mxu0 0
      %468 = vmatpush2.bf16.msra.mxu0 0
      %469 = vmatprep.subr.bf16.mxu0 0
      %470 = vmatpush2.bf16.msra.mxu0 0
      %471 = vmatprep.mubr.bf16.mxu0 0
      %472 = vmatmul.mubr.bf16.gmra.mxu0 %v434
      %v473 = vpop.f32.mrf.mxu0
      %v474 = vadd.f32 %v408, %v473
      %v475 = vpop.f32.mrf.mxu0
      %v476 = vpop.f32.mrf.mxu0
      %v477 = vadd.f32 %v408, %v476
      %v478 = vpop.f32.mrf.mxu0
      %479 = vmatprep.mubr.bf16.mxu0 0
      %480 = vmatmul.mubr.bf16.gmra.mxu0 %v437
      %v481 = vpop.f32.mrf.mxu0
      %v482 = vadd.f32 %v408, %v481
      %v483 = vpop.f32.mrf.mxu0
      %v484 = vpop.f32.mrf.mxu0
      %v485 = vadd.f32 %v408, %v484
      %v486 = vpop.f32.mrf.mxu0
      %487 = vdwg.mxu0
      %v488 = vmax.f32 %v474, 0.0
      %v489 = vmax.f32 %v477, 0.0
      %v490 = vmax.f32 %v482, 0.0
      %v491 = vmax.f32 %v485, 0.0
      %v492 = vpack.c.bf16 %v489, %v488
      %v493 = vpack.c.bf16 %v491, %v490
      %v494 = vld [vmem:[%s3] sm:$0xf]
      %v495 = vld [vmem:[%s3 + $0x4] sm:$0xf]
      %v496 = vld [vmem:[%s6 + $0x2] sm:$0x1]
      %v497 = vlaneseq
      %v498 = vshrl.u32 %v497, 7
      %v499 = vsub.s32 0, %v498
      %v500 = vrot.slane %v496, %v499
      %v503 = vunpack.c.l.b16 %v494
      %v504 = vunpack.c.l.b16 %v495
      %v505 = vpack.c.b16 %v504, %v503
      %vm507 = vcmask 130048
      %v509 = vsel %vm507, %v492, 0
      %v512 = vsel %vm507, %v493, 0
      %514 = vmatprep.subr.bf16.mxu0 0
      %515 = vmatpush1.bf16.msra.mxu0 0
      %516 = vmatprep.subr.bf16.mxu0 0
      %517 = vmatpush1.bf16.msra.mxu0 0
      %518 = vmatprep.subr.bf16.mxu0 0
      %519 = vmatpush1.bf16.msra.mxu0 0
      %520 = vmatprep.subr.bf16.mxu0 0
      %521 = vmatpush1.bf16.msra.mxu0 0
      %522 = vmatprep.subr.bf16.mxu0 0
      %523 = vmatpush1.bf16.msra.mxu0 0
      %524 = vmatprep.subr.bf16.mxu0 0
      %525 = vmatpush1.bf16.msra.mxu0 0
      %526 = vmatprep.subr.bf16.mxu0 0
      %527 = vmatpush1.bf16.msra.mxu0 0
      %528 = vmatprep.subr.bf16.mxu0 0
      %529 = vmatpush1.bf16.msra.mxu0 %v505
      %530 = vmatprep.subr.bf16.mxu0 0
      %531 = vmatpush2.bf16.msra.mxu0 0
      %532 = vmatprep.subr.bf16.mxu0 0
      %533 = vmatpush2.bf16.msra.mxu0 0
      %534 = vmatprep.subr.bf16.mxu0 0
      %535 = vmatpush2.bf16.msra.mxu0 0
      %536 = vmatprep.subr.bf16.mxu0 0
      %537 = vmatpush2.bf16.msra.mxu0 0
      %538 = vmatprep.subr.bf16.mxu0 0
      %539 = vmatpush2.bf16.msra.mxu0 0
      %540 = vmatprep.subr.bf16.mxu0 0
      %541 = vmatpush2.bf16.msra.mxu0 0
      %542 = vmatprep.subr.bf16.mxu0 0
      %543 = vmatpush2.bf16.msra.mxu0 0
      %544 = vmatprep.subr.bf16.mxu0 0
      %545 = vmatpush2.bf16.msra.mxu0 0
      %546 = vmatprep.mubr.bf16.mxu0 0
      %547 = vmatmul.mubr.bf16.gmra.mxu0 %v509
      %v548 = vpop.f32.mrf.mxu0
      %v549 = vadd.f32 %v500, %v548
      %v550 = vpop.f32.mrf.mxu0
      %v551 = vpop.f32.mrf.mxu0
      %v552 = vadd.f32 %v500, %v551
      %v553 = vpop.f32.mrf.mxu0
      %554 = vmatprep.mubr.bf16.mxu0 0
      %555 = vmatmul.mubr.bf16.gmra.mxu0 %v512
      %v556 = vpop.f32.mrf.mxu0
      %v557 = vadd.f32 %v500, %v556
      %v558 = vpop.f32.mrf.mxu0
      %v559 = vpop.f32.mrf.mxu0
      %v560 = vadd.f32 %v500, %v559
      %v561 = vpop.f32.mrf.mxu0
      %562 = vdwg.mxu0
      %v563 = vmax.f32 %v549, 0.0
      %v564 = vmax.f32 %v552, 0.0
      %v565 = vmax.f32 %v557, 0.0
      %v566 = vmax.f32 %v560, 0.0
      %v567 = vpack.c.bf16 %v564, %v563
      %v568 = vpack.c.bf16 %v566, %v565
      %v569 = vld [vmem:[%s4] sm:$0xf]
      %v570 = vld [vmem:[%s4 + $0x4] sm:$0xf]
      %v571 = vld [vmem:[%s6 + $0x3] sm:$0x1]
      %v572 = vlaneseq
      %v573 = vshrl.u32 %v572, 7
      %v574 = vsub.s32 0, %v573
      %v575 = vrot.slane %v571, %v574
      %v578 = vunpack.c.l.b16 %v569
      %v579 = vunpack.c.l.b16 %v570
      %v580 = vpack.c.b16 %v579, %v578
      %v583 = vsel %vm507, %v567, 0
      %v586 = vsel %vm507, %v568, 0
      %588 = vmatprep.subr.bf16.mxu0 0
      %589 = vmatpush1.bf16.msra.mxu0 0
      %590 = vmatprep.subr.bf16.mxu0 0
      %591 = vmatpush1.bf16.msra.mxu0 0
      %592 = vmatprep.subr.bf16.mxu0 0
      %593 = vmatpush1.bf16.msra.mxu0 0
      %594 = vmatprep.subr.bf16.mxu0 0
      %595 = vmatpush1.bf16.msra.mxu0 0
      %596 = vmatprep.subr.bf16.mxu0 0
      %597 = vmatpush1.bf16.msra.mxu0 0
      %598 = vmatprep.subr.bf16.mxu0 0
      %599 = vmatpush1.bf16.msra.mxu0 0
      %600 = vmatprep.subr.bf16.mxu0 0
      %601 = vmatpush1.bf16.msra.mxu0 0
      %602 = vmatprep.subr.bf16.mxu0 0
      %603 = vmatpush1.bf16.msra.mxu0 %v580
      %604 = vmatprep.subr.bf16.mxu0 0
      %605 = vmatpush2.bf16.msra.mxu0 0
      %606 = vmatprep.subr.bf16.mxu0 0
      %607 = vmatpush2.bf16.msra.mxu0 0
      %608 = vmatprep.subr.bf16.mxu0 0
      %609 = vmatpush2.bf16.msra.mxu0 0
      %610 = vmatprep.subr.bf16.mxu0 0
      %611 = vmatpush2.bf16.msra.mxu0 0
      %612 = vmatprep.subr.bf16.mxu0 0
      %613 = vmatpush2.bf16.msra.mxu0 0
      %614 = vmatprep.subr.bf16.mxu0 0
      %615 = vmatpush2.bf16.msra.mxu0 0
      %616 = vmatprep.subr.bf16.mxu0 0
      %617 = vmatpush2.bf16.msra.mxu0 0
      %618 = vmatprep.subr.bf16.mxu0 0
      %619 = vmatpush2.bf16.msra.mxu0 0
      %620 = vmatprep.mubr.bf16.mxu0 0
      %621 = vmatmul.mubr.bf16.gmra.mxu0 %v583
      %v622 = vpop.f32.mrf.mxu0
      %v623 = vadd.f32 %v575, %v622
      %v624 = vpop.f32.mrf.mxu0
      %v625 = vpop.f32.mrf.mxu0
      %v626 = vadd.f32 %v575, %v625
      %v627 = vpop.f32.mrf.mxu0
      %628 = vmatprep.mubr.bf16.mxu0 0
      %629 = vmatmul.mubr.bf16.gmra.mxu0 %v586
      %v630 = vpop.f32.mrf.mxu0
      %v631 = vadd.f32 %v575, %v630
      %v632 = vpop.f32.mrf.mxu0
      %v633 = vpop.f32.mrf.mxu0
      %v634 = vadd.f32 %v575, %v633
      %v635 = vpop.f32.mrf.mxu0
      %636 = vdwg.mxu0
      %v637 = vmax.f32 %v623, 0.0
      %v638 = vmax.f32 %v626, 0.0
      %v639 = vmax.f32 %v631, 0.0
      %v640 = vmax.f32 %v634, 0.0
      %v641 = vpack.c.bf16 %v638, %v637
      %v642 = vpack.c.bf16 %v640, %v639
      %v643 = vld [vmem:[%s5] sm:$0x3]
      %v644 = vld [vmem:[%s6 + $0x4] sm:$0x1]
      %v645 = vlaneseq
      %v646 = vshrl.u32 %v645, 7
      %v647 = vsub.s32 0, %v646
      %v648 = vrot.slane %v644, %v647
      %vm649 = vcmask 31744
      %v651 = vsel %vm649, %v641, 0
      %v654 = vsel %vm649, %v642, 0
      %vm656 = vcmask 1041408
      %v658 = vsel %vm656, %v643, 0
      %660 = vmatprep.subr.bf16.mxu0 0
      %661 = vmatpush1.bf16.msra.mxu0 0
      %662 = vmatprep.subr.bf16.mxu0 0
      %663 = vmatpush1.bf16.msra.mxu0 0
      %664 = vmatprep.subr.bf16.mxu0 0
      %665 = vmatpush1.bf16.msra.mxu0 0
      %666 = vmatprep.subr.bf16.mxu0 0
      %667 = vmatpush1.bf16.msra.mxu0 0
      %668 = vmatprep.subr.bf16.mxu0 0
      %669 = vmatpush1.bf16.msra.mxu0 0
      %670 = vmatprep.subr.bf16.mxu0 0
      %671 = vmatpush1.bf16.msra.mxu0 0
      %672 = vmatprep.subr.bf16.mxu0 0
      %673 = vmatpush1.bf16.msra.mxu0 0
      %674 = vmatprep.subr.bf16.mxu0 0
      %675 = vmatpush1.bf16.msra.mxu0 %v658
      %676 = vmatprep.subr.bf16.mxu0 0
      %677 = vmatpush2.bf16.msra.mxu0 0
      %678 = vmatprep.subr.bf16.mxu0 0
      %679 = vmatpush2.bf16.msra.mxu0 0
      %680 = vmatprep.subr.bf16.mxu0 0
      %681 = vmatpush2.bf16.msra.mxu0 0
      %682 = vmatprep.subr.bf16.mxu0 0
      %683 = vmatpush2.bf16.msra.mxu0 0
      %684 = vmatprep.subr.bf16.mxu0 0
      %685 = vmatpush2.bf16.msra.mxu0 0
      %686 = vmatprep.subr.bf16.mxu0 0
      %687 = vmatpush2.bf16.msra.mxu0 0
      %688 = vmatprep.subr.bf16.mxu0 0
      %689 = vmatpush2.bf16.msra.mxu0 0
      %690 = vmatprep.subr.bf16.mxu0 0
      %691 = vmatpush2.bf16.msra.mxu0 0
      %692 = vmatprep.mubr.bf16.mxu0 0
      %693 = vmatmul.mubr.bf16.gmra.mxu0 %v651
      %v694 = vpop.f32.mrf.mxu0
      %v695 = vadd.f32 %v648, %v694
      %v696 = vpop.f32.mrf.mxu0
      %v697 = vpop.f32.mrf.mxu0
      %v698 = vadd.f32 %v648, %v697
      %v699 = vpop.f32.mrf.mxu0
      %700 = vmatprep.mubr.bf16.mxu0 0
      %701 = vmatmul.mubr.bf16.gmra.mxu0 %v654
      %v702 = vpop.f32.mrf.mxu0
      %v703 = vadd.f32 %v648, %v702
      %v704 = vpop.f32.mrf.mxu0
      %v705 = vpop.f32.mrf.mxu0
      %v706 = vadd.f32 %v648, %v705
      %v707 = vpop.f32.mrf.mxu0
      %708 = vdwg.mxu0
      %vm709 = vcmask 48128
      %710 = vst.msk [vmem:[%s280] sm:$0xff] %vm709, %v695
      %711 = vst.msk [vmem:[%s280 + $0x8] sm:$0xff] %vm709, %v698
      %712 = vst.msk [vmem:[%s280 + $0x10] sm:$0xff] %vm709, %v703
      %713 = vst.msk [vmem:[%s280 + $0x18] sm:$0xff] %vm709, %v706
      %s714 = smul.u32 4, %s18
      %p715 = scmp.lt.s32.totalorder %s714, 7
      %s716 = scalar_select %p715, %s714, 7
      %s717 = smul.addr %s716, 8
      %s718 = scalar_lea.vmem %s7, %s717
      // Predicated region
      $region49: #{imu_mlp_forward.1} parent=47 // pred_check
        %p719 = pneg %p188
      $region50: #{imu_mlp_forward.1} parent=47 // pred_check_branch
        %721 = sbr.rel (%p719) target = $region52
      $region51: #{imu_mlp_forward.1} parent=47 // pred_region
        %s722 = smul.u32 4, %s18
      $region52: #{imu_mlp_forward.1} parent=47 // pred_fallthru
        _
    $region48: #{imu_mlp_forward.1} parent=5 // pred_fallthru
      _
    %p723 = scmp.le.s32.totalorder 2, %s13
    // Predicated region
    $region53: #{imu_mlp_forward.1} parent=5 // pred_check
      %p724 = pneg %p723
    $region54: #{imu_mlp_forward.1} parent=5 // pred_check_branch
      %726 = sbr.rel (%p724) target = $region56
    $region55: #{imu_mlp_forward.1} parent=5 // pred_region
      %s727 = ssub.s32 %s13, 2
      // Predicated region
      $region57: #{imu_mlp_forward.1} parent=55 // pred_check
        %p728 = pneg %p194
      $region58: #{imu_mlp_forward.1} parent=55 // pred_check_branch
        %730 = sbr.rel (%p728) target = $region60
      $region59: #{imu_mlp_forward.1} parent=55 // pred_region
        %s731 = smul.u32 4, %s19
        %p732 = scmp.lt.s32.totalorder %s731, 7
        %s733 = scalar_select %p732, %s731, 7
        %s734 = smul.addr %s733, 8
        %s735 = scalar_lea.vmem %s7, %s734
      $region60: #{imu_mlp_forward.1} parent=55 // pred_fallthru
        _
    $region56: #{imu_mlp_forward.1} parent=5 // pred_fallthru
      _
  $region6: #{imu_mlp_forward.1} parent=0 // loop_footer
    %s17 = sadd.s32 1, %s13
  $region7: #{imu_mlp_forward.1} parent=0 // loop_footer_branch
    %12 = sbr.rel target = $region3
  $region8: #{imu_mlp_forward.1} parent=0 // loop_exit
    _

</llo_original>
